<compile_context>
chip_gen: v7x
topology: tpu7x:2x2x1
jax: 0.10.0
libtpu: 0.0.40
codegen_flags: <defaults>
</compile_context>

<pallas_src>
import jax
import jax.numpy as jnp
from jax.experimental import pallas as pl
from jax.experimental.pallas import tpu as pltpu

LANES = 128
SUBLANES = 8
# Per-step VMEM budget that is safe on every generation (v5e/v6e: 128 MiB
# physical with 16/32 MiB default scoped limit; v7x: 64 MiB physical).
_VMEM_BUDGET = 36 * 1024 * 1024
_VMEM_LIMIT_CAP = 48 * 1024 * 1024


def _round_up(x, m):
    return (x + m - 1) // m * m


# ---------------------------------------------------------------------------
# One-time parameter prep (hoisted out of the forward path per perf review).
# ---------------------------------------------------------------------------
def pad_linear_params(w, b, compute_dtype=jnp.float32):
    """w: (out, in) PyTorch nn.Linear layout, b: (out,).
    Returns (w_t_pad (in, P), b_pad (1, P)) with P = projdim rounded up to 128.
    The weight is stored in compute_dtype (bf16 halves weight HBM/DMA bytes and
    runs the 256-wide bf16 MXU at full rate); the bias stays f32 since it is
    added after f32 accumulation."""
    out_dim, in_dim = w.shape
    P = _round_up(out_dim, LANES)
    w_t = jnp.zeros((in_dim, P), compute_dtype).at[:, :out_dim].set(
        w.T.astype(compute_dtype))
    b_p = jnp.zeros((1, P), jnp.float32).at[:, :out_dim].set(
        b.reshape(1, -1).astype(jnp.float32))
    return w_t, b_p


# ---------------------------------------------------------------------------
# Kernel bodies.
# ---------------------------------------------------------------------------
def _project_normalize(x_ref, w_ref, b_ref):
    """y = x @ W + b ; y / ||y||_2 row-wise.  MXU runs in w_ref.dtype (f32 or
    bf16) with f32 accumulation; the elementwise epilogue is f32.  rsqrt goes to
    the EUP slot; max(ss, tiny) guards zero-padded batch rows against rsqrt(0)."""
    y = jnp.dot(x_ref[...].astype(w_ref.dtype), w_ref[...],
                preferred_element_type=jnp.float32) + b_ref[...]
    ss = jnp.sum(y * y, axis=1, keepdims=True)
    return y * jax.lax.rsqrt(jnp.maximum(ss, 1e-30))


def _fused_kernel(img_ref, imgc_ref, sent_ref, sentc_ref,
                  w_img_ref, w_sent_ref, b_img_ref, b_sent_ref, out_ref):
    # Four separate dots (no jnp.concatenate -> no VMEM copies in front of the
    # MXU); the weights are loaded once and reused for orig + contrastive rows.
    imgproj = _project_normalize(img_ref, w_img_ref, b_img_ref)
    imgcproj = _project_normalize(imgc_ref, w_img_ref, b_img_ref)
    sentproj = _project_normalize(sent_ref, w_sent_ref, b_sent_ref)
    sentcproj = _project_normalize(sentc_ref, w_sent_ref, b_sent_ref)

    # anchor2 = sum(sent*img) is bit-identical to anchor1 = sum(img*sent): dedupe.
    a1 = jnp.sum(imgproj * sentproj, axis=1, keepdims=True)    # (TB, 1)
    isc = jnp.sum(imgproj * sentcproj, axis=1, keepdims=True)  # (TB, 1)
    sic = jnp.sum(sentproj * imgcproj, axis=1, keepdims=True)  # (TB, 1)

    # Lane-dense (TB, 128) slab -> single unmasked full-width store.
    # cols 0,1 = anchor1/anchor2 (identical), col 2 = img_sentc, col 3 = sent_imgc.
    # TODO(synk): at eval-set-scale B, pack lane-major (e.g. an (8, Bp) layout via
    # an XLU transpose) to cut output writeback bytes ~16-32x; irrelevant here.
    col = jax.lax.broadcasted_iota(jnp.int32, out_ref.shape, 1)
    out_ref[...] = (jnp.where(col <= 1, a1, 0.0)
                    + jnp.where(col == 2, isc, 0.0)
                    + jnp.where(col == 3, sic, 0.0))


def _proj_norm_kernel(x_ref, w_ref, b_ref, o_ref):
    o_ref[...] = _project_normalize(x_ref, w_ref, b_ref).astype(o_ref.dtype)


# ---------------------------------------------------------------------------
# Tile / VMEM planning (generation-aware budget, explicit vmem_limit_bytes).
# ---------------------------------------------------------------------------
def _pick_tile_and_limit(B, row_bytes_dbuf, fixed_bytes, tb_max):
    """Largest batch tile (multiple of 8, <= tb_max) whose per-step VMEM estimate
    (double-buffered activations/output + single-buffered weights) fits the
    budget.  Returns (TB, vmem_limit_bytes)."""
    TB = min(tb_max, _round_up(B, SUBLANES))
    step = lambda tb: fixed_bytes + tb * row_bytes_dbuf
    while TB > SUBLANES and step(TB) > _VMEM_BUDGET:
        TB = max(SUBLANES, _round_up(TB // 2, SUBLANES))
    limit = int(min(max(step(TB) * 4 // 3 + (2 << 20), 16 << 20), _VMEM_LIMIT_CAP))
    return TB, limit


# ---------------------------------------------------------------------------
# Public wrappers.
# ---------------------------------------------------------------------------
def coco_fused_forward(img, sent, imgc, sentc,
                       w_img_p, b_img_p, w_sent_p, b_sent_p, *, tb_max=128):
    """proj_image/proj_sentence on (img, imgc)/(sent, sentc) followed by
    COCOProjNet.forward, in ONE pallas_call.  Weights/biases must already be
    padded via pad_linear_params (done once at init).
    Returns (anchor1, anchor2, img_sentc, sent_imgc), each of shape (B,)."""
    B, imgdim = img.shape
    sentdim = sent.shape[1]
    P = w_img_p.shape[1]
    assert w_sent_p.shape == (sentdim, P) and b_img_p.shape == (1, P)

    x_bytes = jnp.dtype(img.dtype).itemsize
    w_bytes = jnp.dtype(w_img_p.dtype).itemsize
    row_dbuf = 2 * (2 * imgdim + 2 * sentdim) * x_bytes + 2 * LANES * 4
    fixed = (imgdim + sentdim) * P * w_bytes + 2 * P * 4
    TB, vmem_limit = _pick_tile_and_limit(B, row_dbuf, fixed, tb_max)

    Bp = _round_up(B, TB)
    pad = lambda x: jnp.pad(x, ((0, Bp - B), (0, 0))) if Bp != B else x

    x_spec = lambda d: pl.BlockSpec((TB, d), lambda i: (i, 0))
    # Grid-invariant blocks: single-buffered (no 2x VMEM for data that never moves).
    const = lambda shape: pl.BlockSpec(shape, lambda i: (0, 0),
                                       pipeline_mode=pl.Buffered(1))

    slab = pl.pallas_call(
        _fused_kernel,
        out_shape=jax.ShapeDtypeStruct((Bp, LANES), jnp.float32),
        grid=(Bp // TB,),
        in_specs=[
            x_spec(imgdim), x_spec(imgdim), x_spec(sentdim), x_spec(sentdim),
            const((imgdim, P)), const((sentdim, P)),
            const((1, P)), const((1, P)),
        ],
        out_specs=pl.BlockSpec((TB, LANES), lambda i: (i, 0)),
        compiler_params=pltpu.CompilerParams(
            dimension_semantics=("parallel",),
            vmem_limit_bytes=vmem_limit),
    )(pad(img), pad(imgc), pad(sent), pad(sentc),
      w_img_p, w_sent_p, b_img_p, b_sent_p)

    anchor1 = slab[:B, 0]
    anchor2 = slab[:B, 1]
    img_sentc = slab[:B, 2]
    sent_imgc = slab[:B, 3]
    return anchor1, anchor2, img_sentc, sent_imgc


def proj_normalize(x, w_p, b_p, projdim, *, tb_max=128):
    """Standalone proj_image / proj_sentence: x @ W + b, row-wise L2 normalize.
    w_p/b_p come from pad_linear_params; output sliced back to (B, projdim)."""
    B, d_in = x.shape
    P = w_p.shape[1]

    x_bytes = jnp.dtype(x.dtype).itemsize
    w_bytes = jnp.dtype(w_p.dtype).itemsize
    row_dbuf = 2 * d_in * x_bytes + 2 * P * 4
    fixed = d_in * P * w_bytes + P * 4
    TB, vmem_limit = _pick_tile_and_limit(B, row_dbuf, fixed, tb_max)

    Bp = _round_up(B, TB)
    xp = jnp.pad(x, ((0, Bp - B), (0, 0))) if Bp != B else x

    out = pl.pallas_call(
        _proj_norm_kernel,
        out_shape=jax.ShapeDtypeStruct((Bp, P), jnp.float32),
        grid=(Bp // TB,),
        in_specs=[
            pl.BlockSpec((TB, d_in), lambda i: (i, 0)),
            pl.BlockSpec((d_in, P), lambda i: (0, 0), pipeline_mode=pl.Buffered(1)),
            pl.BlockSpec((1, P), lambda i: (0, 0), pipeline_mode=pl.Buffered(1)),
        ],
        out_specs=pl.BlockSpec((TB, P), lambda i: (i, 0)),
        compiler_params=pltpu.CompilerParams(
            dimension_semantics=("parallel",),
            vmem_limit_bytes=vmem_limit),
    )(xp, w_p, b_p)
    return out[:B, :projdim]


# ---------------------------------------------------------------------------
# Parameter init (PyTorch nn.Linear style uniform(-1/sqrt(fan_in), 1/sqrt(fan_in)))
# ---------------------------------------------------------------------------
def init_linear(key, in_dim, out_dim):
    kw, kb = jax.random.split(key)
    bound = 1.0 / jnp.sqrt(in_dim)
    w = jax.random.uniform(kw, (out_dim, in_dim), jnp.float32, -bound, bound)
    b = jax.random.uniform(kb, (out_dim,), jnp.float32, -bound, bound)
    return w, b


if __name__ == "__main__":
    config = dict(imgdim=32, sentdim=48, projdim=64, use_cuda=False)
    B = 8

    root = jax.random.PRNGKey(0)
    k_img_w, k_sent_w, k_img, k_sent, k_imgc, k_sentc = jax.random.split(root, 6)

    img_w, img_b = init_linear(k_img_w, config["imgdim"], config["projdim"])
    sent_w, sent_b = init_linear(k_sent_w, config["sentdim"], config["projdim"])

    # Pad (and optionally bf16-cast) params ONCE, outside the forward path.
    w_img_f32, b_img_p = pad_linear_params(img_w, img_b, jnp.float32)
    w_sent_f32, b_sent_p = pad_linear_params(sent_w, sent_b, jnp.float32)
    w_img_bf16, _ = pad_linear_params(img_w, img_b, jnp.bfloat16)
    w_sent_bf16, _ = pad_linear_params(sent_w, sent_b, jnp.bfloat16)

    img = jax.random.normal(k_img, (B, config["imgdim"]), jnp.float32)
    sent = jax.random.normal(k_sent, (B, config["sentdim"]), jnp.float32)
    imgc = jax.random.normal(k_imgc, (B, config["imgdim"]), jnp.float32)
    sentc = jax.random.normal(k_sentc, (B, config["sentdim"]), jnp.float32)

    # Fused kernel, f32 MXU path (exact-parity check against the reference).
    outs_f32 = coco_fused_forward(img, sent, imgc, sentc,
                                  w_img_f32, b_img_p, w_sent_f32, b_sent_p)
    # Fused kernel, bf16-weight MXU path (production setting: half the weight
    # DMA bytes, full-rate bf16 MXU; f32 accumulation + f32 epilogue).
    outs_bf16 = coco_fused_forward(img, sent, imgc, sentc,
                                   w_img_bf16, b_img_p, w_sent_bf16, b_sent_p)
    # Standalone projection kernel (module's proj_image / proj_sentence).
    imgproj_k = proj_normalize(img, w_img_f32, b_img_p, config["projdim"])
    sentproj_k = proj_normalize(sent, w_sent_f32, b_sent_p, config["projdim"])
    jax.block_until_ready((outs_f32, outs_bf16, imgproj_k, sentproj_k))

    # Pure-JAX reference (mirrors the PyTorch module).
    def ref_proj(x, w, b):
        y = x @ w.T + b
        return y / jnp.sqrt(jnp.sum(y * y, axis=1, keepdims=True))

    rip = ref_proj(img, img_w, img_b)
    rsp = ref_proj(sent, sent_w, sent_b)
    ricp = ref_proj(imgc, img_w, img_b)
    rscp = ref_proj(sentc, sent_w, sent_b)
    refs = (jnp.sum(rip * rsp, 1), jnp.sum(rsp * rip, 1),
            jnp.sum(rip * rscp, 1), jnp.sum(rsp * ricp, 1))

    for got, want in zip(outs_f32, refs):
        assert jnp.allclose(got, want, atol=2e-5), (got, want)
    for got, want in zip(outs_bf16, refs):
        assert jnp.allclose(got, want, atol=1e-2), (got, want)
    assert jnp.allclose(imgproj_k, rip, atol=2e-5)
    assert jnp.allclose(sentproj_k, rsp, atol=2e-5)

    print("KERNEL_OK")
</pallas_src>

<mosaic_0001>
module attributes {stable_mosaic.version = 11 : i64} {
  func.func @_fused_kernel(%arg0: i32, %arg1: memref<8x32xf32, #tpu.memory_space<vmem>>, %arg2: memref<8x32xf32, #tpu.memory_space<vmem>>, %arg3: memref<8x48xf32, #tpu.memory_space<vmem>>, %arg4: memref<8x48xf32, #tpu.memory_space<vmem>>, %arg5: memref<32x128xf32, #tpu.memory_space<vmem>>, %arg6: memref<48x128xf32, #tpu.memory_space<vmem>>, %arg7: memref<1x128xf32, #tpu.memory_space<vmem>>, %arg8: memref<1x128xf32, #tpu.memory_space<vmem>>, %arg9: memref<8x128xf32, #tpu.memory_space<vmem>>) attributes {dimension_semantics = [#tpu.dimension_semantics<parallel>], iteration_bounds = array<i64: 1>, scalar_prefetch = 0 : i64, scratch_operands = 0 : i64, tpu.core_type = #tpu.core_type<tc>, window_params = [{transform_indices = @transform_0, window_bounds = array<i64: 8, 32>}, {transform_indices = @transform_1, window_bounds = array<i64: 8, 32>}, {transform_indices = @transform_2, window_bounds = array<i64: 8, 48>}, {transform_indices = @transform_3, window_bounds = array<i64: 8, 48>}, {pipeline_mode = #tpu.pipeline_mode<synchronous>, transform_indices = @transform_4, window_bounds = array<i64: 32, 128>}, {pipeline_mode = #tpu.pipeline_mode<synchronous>, transform_indices = @transform_5, window_bounds = array<i64: 48, 128>}, {pipeline_mode = #tpu.pipeline_mode<synchronous>, transform_indices = @transform_6, window_bounds = array<i64: 1, 128>}, {pipeline_mode = #tpu.pipeline_mode<synchronous>, transform_indices = @transform_7, window_bounds = array<i64: 1, 128>}, {transform_indices = @transform_8, window_bounds = array<i64: 8, 128>}]} {
    %c0 = arith.constant 0 : index
    %c0_0 = arith.constant 0 : index
    %0 = vector.load %arg1[%c0, %c0_0] : memref<8x32xf32, #tpu.memory_space<vmem>>, vector<8x32xf32>
    %c0_1 = arith.constant 0 : index
    %c0_2 = arith.constant 0 : index
    %1 = vector.load %arg5[%c0_1, %c0_2] : memref<32x128xf32, #tpu.memory_space<vmem>>, vector<32x128xf32>
    %cst = arith.constant dense<0.000000e+00> : vector<8x128xf32>
    %2 = tpu.matmul %0, %1, %cst {dimension_numbers = #tpu.dot_dimension_numbers<[1], [0], [0], [1], [0, 0, 1, 1], [], []>} : vector<8x32xf32>, vector<32x128xf32>, vector<8x128xf32> -> vector<8x128xf32>
    %c0_3 = arith.constant 0 : index
    %c0_4 = arith.constant 0 : index
    %3 = vector.load %arg7[%c0_3, %c0_4] : memref<1x128xf32, #tpu.memory_space<vmem>>, vector<1x128xf32>
    %4 = vector.broadcast %3 : vector<1x128xf32> to vector<8x128xf32>
    %5 = arith.addf %2, %4 : vector<8x128xf32>
    %6 = arith.mulf %5, %5 : vector<8x128xf32>
    %cst_5 = arith.constant dense<0.000000e+00> : vector<8xf32>
    %7 = vector.multi_reduction <add>, %6, %cst_5 [1] : vector<8x128xf32> to vector<8xf32>
    %8 = vector.shape_cast %7 : vector<8xf32> to vector<8x1xf32>
    %cst_6 = arith.constant 1.000000e-30 : f32
    %9 = vector.broadcast %cst_6 : f32 to vector<8x1xf32>
    %10 = arith.maximumf %8, %9 : vector<8x1xf32>
    %11 = math.rsqrt %10 : vector<8x1xf32>
    %12 = vector.broadcast %11 : vector<8x1xf32> to vector<8x128xf32>
    %13 = arith.mulf %5, %12 : vector<8x128xf32>
    %c0_7 = arith.constant 0 : index
    %c0_8 = arith.constant 0 : index
    %14 = vector.load %arg2[%c0_7, %c0_8] : memref<8x32xf32, #tpu.memory_space<vmem>>, vector<8x32xf32>
    %c0_9 = arith.constant 0 : index
    %c0_10 = arith.constant 0 : index
    %15 = vector.load %arg5[%c0_9, %c0_10] : memref<32x128xf32, #tpu.memory_space<vmem>>, vector<32x128xf32>
    %cst_11 = arith.constant dense<0.000000e+00> : vector<8x128xf32>
    %16 = tpu.matmul %14, %15, %cst_11 {dimension_numbers = #tpu.dot_dimension_numbers<[1], [0], [0], [1], [0, 0, 1, 1], [], []>} : vector<8x32xf32>, vector<32x128xf32>, vector<8x128xf32> -> vector<8x128xf32>
    %c0_12 = arith.constant 0 : index
    %c0_13 = arith.constant 0 : index
    %17 = vector.load %arg7[%c0_12, %c0_13] : memref<1x128xf32, #tpu.memory_space<vmem>>, vector<1x128xf32>
    %18 = vector.broadcast %17 : vector<1x128xf32> to vector<8x128xf32>
    %19 = arith.addf %16, %18 : vector<8x128xf32>
    %20 = arith.mulf %19, %19 : vector<8x128xf32>
    %cst_14 = arith.constant dense<0.000000e+00> : vector<8xf32>
    %21 = vector.multi_reduction <add>, %20, %cst_14 [1] : vector<8x128xf32> to vector<8xf32>
    %22 = vector.shape_cast %21 : vector<8xf32> to vector<8x1xf32>
    %cst_15 = arith.constant 1.000000e-30 : f32
    %23 = vector.broadcast %cst_15 : f32 to vector<8x1xf32>
    %24 = arith.maximumf %22, %23 : vector<8x1xf32>
    %25 = math.rsqrt %24 : vector<8x1xf32>
    %26 = vector.broadcast %25 : vector<8x1xf32> to vector<8x128xf32>
    %27 = arith.mulf %19, %26 : vector<8x128xf32>
    %c0_16 = arith.constant 0 : index
    %c0_17 = arith.constant 0 : index
    %28 = vector.load %arg3[%c0_16, %c0_17] : memref<8x48xf32, #tpu.memory_space<vmem>>, vector<8x48xf32>
    %c0_18 = arith.constant 0 : index
    %c0_19 = arith.constant 0 : index
    %29 = vector.load %arg6[%c0_18, %c0_19] : memref<48x128xf32, #tpu.memory_space<vmem>>, vector<48x128xf32>
    %cst_20 = arith.constant dense<0.000000e+00> : vector<8x128xf32>
    %30 = tpu.matmul %28, %29, %cst_20 {dimension_numbers = #tpu.dot_dimension_numbers<[1], [0], [0], [1], [0, 0, 1, 1], [], []>} : vector<8x48xf32>, vector<48x128xf32>, vector<8x128xf32> -> vector<8x128xf32>
    %c0_21 = arith.constant 0 : index
    %c0_22 = arith.constant 0 : index
    %31 = vector.load %arg8[%c0_21, %c0_22] : memref<1x128xf32, #tpu.memory_space<vmem>>, vector<1x128xf32>
    %32 = vector.broadcast %31 : vector<1x128xf32> to vector<8x128xf32>
    %33 = arith.addf %30, %32 : vector<8x128xf32>
    %34 = arith.mulf %33, %33 : vector<8x128xf32>
    %cst_23 = arith.constant dense<0.000000e+00> : vector<8xf32>
    %35 = vector.multi_reduction <add>, %34, %cst_23 [1] : vector<8x128xf32> to vector<8xf32>
    %36 = vector.shape_cast %35 : vector<8xf32> to vector<8x1xf32>
    %cst_24 = arith.constant 1.000000e-30 : f32
    %37 = vector.broadcast %cst_24 : f32 to vector<8x1xf32>
    %38 = arith.maximumf %36, %37 : vector<8x1xf32>
    %39 = math.rsqrt %38 : vector<8x1xf32>
    %40 = vector.broadcast %39 : vector<8x1xf32> to vector<8x128xf32>
    %41 = arith.mulf %33, %40 : vector<8x128xf32>
    %c0_25 = arith.constant 0 : index
    %c0_26 = arith.constant 0 : index
    %42 = vector.load %arg4[%c0_25, %c0_26] : memref<8x48xf32, #tpu.memory_space<vmem>>, vector<8x48xf32>
    %c0_27 = arith.constant 0 : index
    %c0_28 = arith.constant 0 : index
    %43 = vector.load %arg6[%c0_27, %c0_28] : memref<48x128xf32, #tpu.memory_space<vmem>>, vector<48x128xf32>
    %cst_29 = arith.constant dense<0.000000e+00> : vector<8x128xf32>
    %44 = tpu.matmul %42, %43, %cst_29 {dimension_numbers = #tpu.dot_dimension_numbers<[1], [0], [0], [1], [0, 0, 1, 1], [], []>} : vector<8x48xf32>, vector<48x128xf32>, vector<8x128xf32> -> vector<8x128xf32>
    %c0_30 = arith.constant 0 : index
    %c0_31 = arith.constant 0 : index
    %45 = vector.load %arg8[%c0_30, %c0_31] : memref<1x128xf32, #tpu.memory_space<vmem>>, vector<1x128xf32>
    %46 = vector.broadcast %45 : vector<1x128xf32> to vector<8x128xf32>
    %47 = arith.addf %44, %46 : vector<8x128xf32>
    %48 = arith.mulf %47, %47 : vector<8x128xf32>
    %cst_32 = arith.constant dense<0.000000e+00> : vector<8xf32>
    %49 = vector.multi_reduction <add>, %48, %cst_32 [1] : vector<8x128xf32> to vector<8xf32>
    %50 = vector.shape_cast %49 : vector<8xf32> to vector<8x1xf32>
    %cst_33 = arith.constant 1.000000e-30 : f32
    %51 = vector.broadcast %cst_33 : f32 to vector<8x1xf32>
    %52 = arith.maximumf %50, %51 : vector<8x1xf32>
    %53 = math.rsqrt %52 : vector<8x1xf32>
    %54 = vector.broadcast %53 : vector<8x1xf32> to vector<8x128xf32>
    %55 = arith.mulf %47, %54 : vector<8x128xf32>
    %56 = arith.mulf %13, %41 : vector<8x128xf32>
    %cst_34 = arith.constant dense<0.000000e+00> : vector<8xf32>
    %57 = vector.multi_reduction <add>, %56, %cst_34 [1] : vector<8x128xf32> to vector<8xf32>
    %58 = vector.shape_cast %57 : vector<8xf32> to vector<8x1xf32>
    %59 = arith.mulf %13, %55 : vector<8x128xf32>
    %cst_35 = arith.constant dense<0.000000e+00> : vector<8xf32>
    %60 = vector.multi_reduction <add>, %59, %cst_35 [1] : vector<8x128xf32> to vector<8xf32>
    %61 = vector.shape_cast %60 : vector<8xf32> to vector<8x1xf32>
    %62 = arith.mulf %41, %27 : vector<8x128xf32>
    %cst_36 = arith.constant dense<0.000000e+00> : vector<8xf32>
    %63 = vector.multi_reduction <add>, %62, %cst_36 [1] : vector<8x128xf32> to vector<8xf32>
    %64 = vector.shape_cast %63 : vector<8xf32> to vector<8x1xf32>
    %65 = tpu.iota {dimensions = array<i32: 1>} : vector<8x128xi32>
    %c1_i32 = arith.constant 1 : i32
    %66 = vector.broadcast %c1_i32 : i32 to vector<8x128xi32>
    %67 = arith.cmpi sle, %65, %66 : vector<8x128xi32>
    %cst_37 = arith.constant 0.000000e+00 : f32
    %68 = vector.shape_cast %58 : vector<8x1xf32> to vector<8x1xf32>
    %69 = vector.broadcast %68 : vector<8x1xf32> to vector<8x128xf32>
    %70 = vector.broadcast %cst_37 : f32 to vector<8x128xf32>
    %71 = arith.select %67, %69, %70 : vector<8x128xi1>, vector<8x128xf32>
    %c2_i32 = arith.constant 2 : i32
    %72 = vector.broadcast %c2_i32 : i32 to vector<8x128xi32>
    %73 = arith.cmpi eq, %65, %72 : vector<8x128xi32>
    %cst_38 = arith.constant 0.000000e+00 : f32
    %74 = vector.shape_cast %61 : vector<8x1xf32> to vector<8x1xf32>
    %75 = vector.broadcast %74 : vector<8x1xf32> to vector<8x128xf32>
    %76 = vector.broadcast %cst_38 : f32 to vector<8x128xf32>
    %77 = arith.select %73, %75, %76 : vector<8x128xi1>, vector<8x128xf32>
    %78 = arith.addf %71, %77 : vector<8x128xf32>
    %c3_i32 = arith.constant 3 : i32
    %79 = vector.broadcast %c3_i32 : i32 to vector<8x128xi32>
    %80 = arith.cmpi eq, %65, %79 : vector<8x128xi32>
    %cst_39 = arith.constant 0.000000e+00 : f32
    %81 = vector.shape_cast %64 : vector<8x1xf32> to vector<8x1xf32>
    %82 = vector.broadcast %81 : vector<8x1xf32> to vector<8x128xf32>
    %83 = vector.broadcast %cst_39 : f32 to vector<8x128xf32>
    %84 = arith.select %80, %82, %83 : vector<8x128xi1>, vector<8x128xf32>
    %85 = arith.addf %78, %84 : vector<8x128xf32>
    %c0_40 = arith.constant 0 : index
    %c0_41 = arith.constant 0 : index
    %86 = vector.load %arg9[%c0_40, %c0_41] : memref<8x128xf32, #tpu.memory_space<vmem>>, vector<8x128xf32>
    tpu.vector_store %arg9[%c0_40, %c0_41], %85 {strides = array<i32>} : memref<8x128xf32, #tpu.memory_space<vmem>>, vector<8x128xf32>,
    return
  }
  func.func @transform_0(%arg0: i32) -> (i32, i32) {
    %c0_i32 = arith.constant 0 : i32
    %c0_i32_0 = arith.constant 0 : i32
    return %arg0, %c0_i32 : i32, i32
  }
  func.func @transform_1(%arg0: i32) -> (i32, i32) {
    %c0_i32 = arith.constant 0 : i32
    %c0_i32_0 = arith.constant 0 : i32
    return %arg0, %c0_i32 : i32, i32
  }
  func.func @transform_2(%arg0: i32) -> (i32, i32) {
    %c0_i32 = arith.constant 0 : i32
    %c0_i32_0 = arith.constant 0 : i32
    return %arg0, %c0_i32 : i32, i32
  }
  func.func @transform_3(%arg0: i32) -> (i32, i32) {
    %c0_i32 = arith.constant 0 : i32
    %c0_i32_0 = arith.constant 0 : i32
    return %arg0, %c0_i32 : i32, i32
  }
  func.func @transform_4(%arg0: i32) -> (i32, i32) {
    %c0_i32 = arith.constant 0 : i32
    %c0_i32_0 = arith.constant 0 : i32
    %c0_i32_1 = arith.constant 0 : i32
    return %c0_i32, %c0_i32_0 : i32, i32
  }
  func.func @transform_5(%arg0: i32) -> (i32, i32) {
    %c0_i32 = arith.constant 0 : i32
    %c0_i32_0 = arith.constant 0 : i32
    %c0_i32_1 = arith.constant 0 : i32
    return %c0_i32, %c0_i32_0 : i32, i32
  }
  func.func @transform_6(%arg0: i32) -> (i32, i32) {
    %c0_i32 = arith.constant 0 : i32
    %c0_i32_0 = arith.constant 0 : i32
    %c0_i32_1 = arith.constant 0 : i32
    return %c0_i32, %c0_i32_0 : i32, i32
  }
  func.func @transform_7(%arg0: i32) -> (i32, i32) {
    %c0_i32 = arith.constant 0 : i32
    %c0_i32_0 = arith.constant 0 : i32
    %c0_i32_1 = arith.constant 0 : i32
    return %c0_i32, %c0_i32_0 : i32, i32
  }
  func.func @transform_8(%arg0: i32) -> (i32, i32) {
    %c0_i32 = arith.constant 0 : i32
    %c0_i32_0 = arith.constant 0 : i32
    return %arg0, %c0_i32 : i32, i32
  }
}

</mosaic_0001>

<llo_original>
// kernel: tpu_custom_call.1
$region0: #{tpu_custom_call.1}
  #allocation0 [shape = 'u32[]', space=smem, size = 0x4, offset = 0x4, fixed_abs, tag = 'smem constant byte address 0x4 - core index']
  #allocation1 [shape = 'u32[144,128]{1,0:T(1,128)}', space=vmem, size = 0x12000, scoped, tag = 'internal scratch']
  %s0 = inlined_call_operand.hbm [shape: f32[8,32], index: 0, kind: input, shape index: {}]
  %s1 = inlined_call_operand.hbm [shape: f32[8,32], index: 1, kind: input, shape index: {}]
  %s2 = inlined_call_operand.hbm [shape: f32[8,48], index: 2, kind: input, shape index: {}]
  %s3 = inlined_call_operand.vmem [shape: f32[8,48], index: 3, kind: input, shape index: {}]
  %s4 = inlined_call_operand.hbm [shape: f32[32,128], index: 4, kind: input, shape index: {}]
  %s5 = inlined_call_operand.hbm [shape: f32[48,128], index: 5, kind: input, shape index: {}]
  %s6 = inlined_call_operand.vmem [shape: f32[1,128], index: 6, kind: input, shape index: {}]
  %s7 = inlined_call_operand.vmem [shape: f32[1,128], index: 7, kind: input, shape index: {}]
  %s8 = inlined_call_operand.hbm [shape: f32[8,128], index: 8, kind: output, shape index: {}]
  %s9 = sld [smem:[#allocation0]]
  $region62: #{tpu_custom_call.1} parent=0
    _
  %s11 = ssub.s32 1, %s9
  %s12 = scalar_select 0, %s11, %s9
  $region1: #{tpu_custom_call.1} parent=0
    #allocation2 [shape = 'u8[4096]{0}', space=vmem, size = 0x1000, scoped, tag = 'input window, operand 0, single buffered']
    #allocation3 [shape = 's32[1]{0}', space=sflag, size = 0x4, scoped, tag = 'scoped memory for tpu_custom_call.1']
    #allocation4 [shape = 's32[1]{0}', space=sflag, size = 0x4, scoped, tag = 'scoped memory for tpu_custom_call.1']
    #allocation5 [shape = 'u8[4096]{0}', space=vmem, size = 0x1000, scoped, tag = 'input window, operand 1, single buffered']
    #allocation6 [shape = 's32[1]{0}', space=sflag, size = 0x4, scoped, tag = 'scoped memory for tpu_custom_call.1']
    #allocation7 [shape = 'u8[4096]{0}', space=vmem, size = 0x1000, scoped, tag = 'input window, operand 2, single buffered']
    #allocation8 [shape = 'u8[16384]{0}', space=vmem, size = 0x4000, scoped, tag = 'input window, operand 4, single buffered']
    #allocation9 [shape = 's32[1]{0}', space=sflag, size = 0x4, scoped, tag = 'scoped memory for tpu_custom_call.1']
    #allocation10 [shape = 'u8[24576]{0}', space=vmem, size = 0x6000, scoped, tag = 'input window, operand 5, single buffered']
    #allocation11 [shape = 'u8[4096]{0}', space=vmem, size = 0x1000, scoped, tag = 'output window, operand 0, single buffered']
    %13 = vsyncpa [#allocation3], 0
    %14 = vsyncpa [#allocation6], 0
    %15 = vsyncpa [#allocation9], 0
    %16 = vsyncpa [#allocation4], 0
    // Predicated region
    $region2: #{tpu_custom_call.1} parent=1 // pred_check
      _
    $region3: #{tpu_custom_call.1} parent=1 // pred_check_branch
      %18 = sbr.rel (0) target = $region5
    $region4: #{tpu_custom_call.1} parent=1 // pred_region
      %s20 = ssub.s32 128, 128
      %21 = vsyncadd [#allocation3], %s20
      %s23 = sshll.u32 [#allocation2], 4
      %s24 = int_to_ptr.vmem [resolvable:$true] %s23
      %26 = dma.hbm_to_vmem [thread:$0]  %s0, 128, %s24, [#allocation3]
    $region5: #{tpu_custom_call.1} parent=1 // pred_fallthru
      _
    // Predicated region
    $region6: #{tpu_custom_call.1} parent=1 // pred_check
      _
    $region7: #{tpu_custom_call.1} parent=1 // pred_check_branch
      %28 = sbr.rel (0) target = $region9
    $region8: #{tpu_custom_call.1} parent=1 // pred_region
      %s30 = ssub.s32 128, 128
      %31 = vsyncadd [#allocation6], %s30
      %s33 = sshll.u32 [#allocation5], 4
      %s34 = int_to_ptr.vmem [resolvable:$true] %s33
      %36 = dma.hbm_to_vmem [thread:$0]  %s1, 128, %s34, [#allocation6]
    $region9: #{tpu_custom_call.1} parent=1 // pred_fallthru
      _
    // Predicated region
    $region10: #{tpu_custom_call.1} parent=1 // pred_check
      _
    $region11: #{tpu_custom_call.1} parent=1 // pred_check_branch
      %38 = sbr.rel (0) target = $region13
    $region12: #{tpu_custom_call.1} parent=1 // pred_region
      %s40 = ssub.s32 128, 128
      %41 = vsyncadd [#allocation6], %s40
      %s43 = sshll.u32 [#allocation7], 4
      %s44 = int_to_ptr.vmem [resolvable:$true] %s43
      %46 = dma.hbm_to_vmem [thread:$0]  %s2, 128, %s44, [#allocation6]
    $region13: #{tpu_custom_call.1} parent=1 // pred_fallthru
      _
    // Predicated region
    $region14: #{tpu_custom_call.1} parent=1 // pred_check
      _
    $region15: #{tpu_custom_call.1} parent=1 // pred_check_branch
      %48 = sbr.rel (0) target = $region17
    $region16: #{tpu_custom_call.1} parent=1 // pred_region
      _
    $region17: #{tpu_custom_call.1} parent=1 // pred_fallthru
      _
    // Predicated region
    $region18: #{tpu_custom_call.1} parent=1 // pred_check
      _
    $region19: #{tpu_custom_call.1} parent=1 // pred_check_branch
      %50 = sbr.rel (0) target = $region21
    $region20: #{tpu_custom_call.1} parent=1 // pred_region
      %s52 = ssub.s32 512, 512
      %53 = vsyncadd [#allocation9], %s52
      %s54 = sshll.u32 [#allocation8], 4
      %s55 = int_to_ptr.vmem [resolvable:$true] %s54
      %60 = dma.hbm_to_vmem [thread:$0]  %s4, 512, %s55, [#allocation9], 128, 128, 8
    $region21: #{tpu_custom_call.1} parent=1 // pred_fallthru
      _
    // Predicated region
    $region22: #{tpu_custom_call.1} parent=1 // pred_check
      _
    $region23: #{tpu_custom_call.1} parent=1 // pred_check_branch
      %62 = sbr.rel (0) target = $region25
    $region24: #{tpu_custom_call.1} parent=1 // pred_region
      %s64 = ssub.s32 768, 768
      %65 = vsyncadd [#allocation9], %s64
      %s66 = sshll.u32 [#allocation10], 4
      %s67 = int_to_ptr.vmem [resolvable:$true] %s66
      %72 = dma.hbm_to_vmem [thread:$0]  %s5, 768, %s67, [#allocation9], 128, 128, 8
    $region25: #{tpu_custom_call.1} parent=1 // pred_fallthru
      _
    // Predicated region
    $region26: #{tpu_custom_call.1} parent=1 // pred_check
      _
    $region27: #{tpu_custom_call.1} parent=1 // pred_check_branch
      %74 = sbr.rel (0) target = $region29
    $region28: #{tpu_custom_call.1} parent=1 // pred_region
      _
    $region29: #{tpu_custom_call.1} parent=1 // pred_fallthru
      _
    // Predicated region
    $region30: #{tpu_custom_call.1} parent=1 // pred_check
      _
    $region31: #{tpu_custom_call.1} parent=1 // pred_check_branch
      %76 = sbr.rel (0) target = $region33
    $region32: #{tpu_custom_call.1} parent=1 // pred_region
      _
    $region33: #{tpu_custom_call.1} parent=1 // pred_fallthru
      _
    // Predicated region
    $region34: #{tpu_custom_call.1} parent=1 // pred_check
      _
    $region35: #{tpu_custom_call.1} parent=1 // pred_check_branch
      %78 = sbr.rel (0) target = $region37
    $region36: #{tpu_custom_call.1} parent=1 // pred_region
      %79 = dma.done [#allocation3], 128
    $region37: #{tpu_custom_call.1} parent=1 // pred_fallthru
      _
    // Predicated region
    $region38: #{tpu_custom_call.1} parent=1 // pred_check
      _
    $region39: #{tpu_custom_call.1} parent=1 // pred_check_branch
      %81 = sbr.rel (0) target = $region41
    $region40: #{tpu_custom_call.1} parent=1 // pred_region
      %82 = dma.done [#allocation6], 128
    $region41: #{tpu_custom_call.1} parent=1 // pred_fallthru
      _
    // Predicated region
    $region42: #{tpu_custom_call.1} parent=1 // pred_check
      _
    $region43: #{tpu_custom_call.1} parent=1 // pred_check_branch
      %84 = sbr.rel (0) target = $region45
    $region44: #{tpu_custom_call.1} parent=1 // pred_region
      %85 = dma.done [#allocation6], 128
    $region45: #{tpu_custom_call.1} parent=1 // pred_fallthru
      _
    // Predicated region
    $region46: #{tpu_custom_call.1} parent=1 // pred_check
      _
    $region47: #{tpu_custom_call.1} parent=1 // pred_check_branch
      %87 = sbr.rel (0) target = $region49
    $region48: #{tpu_custom_call.1} parent=1 // pred_region
      %88 = dma.done [#allocation9], 512
    $region49: #{tpu_custom_call.1} parent=1 // pred_fallthru
      _
    // Predicated region
    $region50: #{tpu_custom_call.1} parent=1 // pred_check
      _
    $region51: #{tpu_custom_call.1} parent=1 // pred_check_branch
      %90 = sbr.rel (0) target = $region53
    $region52: #{tpu_custom_call.1} parent=1 // pred_region
      %91 = dma.done [#allocation9], 768
    $region53: #{tpu_custom_call.1} parent=1 // pred_fallthru
      _
    %v92 = vld [vmem:[#allocation2] sm:$0xff]
    %v93 = vld [vmem:[#allocation8] sm:$0xff]
    %v94 = vld [vmem:[#allocation8 + $0x8] sm:$0xff]
    %v95 = vld [vmem:[#allocation8 + $0x10] sm:$0xff]
    %v96 = vld [vmem:[#allocation8 + $0x18] sm:$0xff]
    %v97 = vld [vmem:[%s6] sm:$0x1]
    %v99 = vlaneseq
    %v100 = vshrl.u32 %v99, 7
    %v101 = vsub.s32 0, %v100
    %v102 = vrot.slane %v97, %v101
    %vm104 = vcmask 261120
    %v106 = vsel %vm104, %v92, 0
    %108 = vmatprep.subr.mxu0 0.0
    %109 = vmatpush1.msra.mxu0 %v93
    %110 = vmatprep.subr.mxu0 0.0
    %111 = vmatpush1.msra.mxu0 %v94
    %112 = vmatprep.subr.mxu0 0.0
    %113 = vmatpush1.msra.mxu0 %v95
    %114 = vmatprep.subr.mxu0 0.0
    %115 = vmatpush1.msra.mxu0 %v96
    %116 = vmatprep.subr.mxu0 0.0
    %117 = vmatpush1.msra.mxu0 0.0
    %118 = vmatprep.subr.mxu0 0.0
    %119 = vmatpush1.msra.mxu0 0.0
    %120 = vmatprep.subr.mxu0 0.0
    %121 = vmatpush1.msra.mxu0 0.0
    %122 = vmatprep.subr.mxu0 0.0
    %123 = vmatpush1.msra.mxu0 0.0
    %124 = vmatprep.subr.mxu0 0.0
    %125 = vmatpush1.msra.mxu0 0.0
    %126 = vmatprep.subr.mxu0 0.0
    %127 = vmatpush1.msra.mxu0 0.0
    %128 = vmatprep.subr.mxu0 0.0
    %129 = vmatpush1.msra.mxu0 0.0
    %130 = vmatprep.subr.mxu0 0.0
    %131 = vmatpush1.msra.mxu0 0.0
    %132 = vmatprep.subr.mxu0 0.0
    %133 = vmatpush1.msra.mxu0 0.0
    %134 = vmatprep.subr.mxu0 0.0
    %135 = vmatpush1.msra.mxu0 0.0
    %136 = vmatprep.subr.mxu0 0.0
    %137 = vmatpush1.msra.mxu0 0.0
    %138 = vmatprep.subr.mxu0 0.0
    %139 = vmatpush1.msra.mxu0 0.0
    %140 = vmatprep.subr.mxu0 0.0
    %141 = vmatpush1.msra.mxu0 0.0
    %142 = vmatprep.subr.mxu0 0.0
    %143 = vmatpush1.msra.mxu0 0.0
    %144 = vmatprep.subr.mxu0 0.0
    %145 = vmatpush1.msra.mxu0 0.0
    %146 = vmatprep.subr.mxu0 0.0
    %147 = vmatpush1.msra.mxu0 0.0
    %148 = vmatprep.subr.mxu0 0.0
    %149 = vmatpush1.msra.mxu0 0.0
    %150 = vmatprep.subr.mxu0 0.0
    %151 = vmatpush1.msra.mxu0 0.0
    %152 = vmatprep.subr.mxu0 0.0
    %153 = vmatpush1.msra.mxu0 0.0
    %154 = vmatprep.subr.mxu0 0.0
    %155 = vmatpush1.msra.mxu0 0.0
    %156 = vmatprep.subr.mxu0 0.0
    %157 = vmatpush1.msra.mxu0 0.0
    %158 = vmatprep.subr.mxu0 0.0
    %159 = vmatpush1.msra.mxu0 0.0
    %160 = vmatprep.subr.mxu0 0.0
    %161 = vmatpush1.msra.mxu0 0.0
    %162 = vmatprep.subr.mxu0 0.0
    %163 = vmatpush1.msra.mxu0 0.0
    %164 = vmatprep.subr.mxu0 0.0
    %165 = vmatpush1.msra.mxu0 0.0
    %166 = vmatprep.subr.mxu0 0.0
    %167 = vmatpush1.msra.mxu0 0.0
    %168 = vmatprep.subr.mxu0 0.0
    %169 = vmatpush1.msra.mxu0 0.0
    %170 = vmatprep.subr.mxu0 0.0
    %171 = vmatpush1.msra.mxu0 0.0
    %172 = vmatprep.mubr.f32.mxu0 0.0
    %173 = vmatmul.mubr.f32.gmra.mrb[0].mxu0 %v106
    %v174 = vpop.f32.mrb[0].mxu0
    %v175 = vadd.f32 %v102, %v174
    %v176 = vpop.f32.mrb[0].mxu0
    %177 = vdwg.mxu0
    %v178 = vmul.f32 %v175, %v175
    %179 = vadd.xlane.f32.xlu0 %v178
    %v180 = vpop.xlane.xlu0 %179
    %v181 = vmax.f32 %v180, 1e-30
    %v182 = vrsqrt.pop %v181
    %v183 = vmul.f32 %v175, %v182
    %v184 = vld [vmem:[#allocation5] sm:$0xff]
    %v186 = vsel %vm104, %v184, 0
    %188 = vmatprep.subr.mxu0 0.0
    %189 = vmatpush1.msra.mxu0 %v93
    %190 = vmatprep.subr.mxu0 0.0
    %191 = vmatpush1.msra.mxu0 %v94
    %192 = vmatprep.subr.mxu0 0.0
    %193 = vmatpush1.msra.mxu0 %v95
    %194 = vmatprep.subr.mxu0 0.0
    %195 = vmatpush1.msra.mxu0 %v96
    %196 = vmatprep.subr.mxu0 0.0
    %197 = vmatpush1.msra.mxu0 0.0
    %198 = vmatprep.subr.mxu0 0.0
    %199 = vmatpush1.msra.mxu0 0.0
    %200 = vmatprep.subr.mxu0 0.0
    %201 = vmatpush1.msra.mxu0 0.0
    %202 = vmatprep.subr.mxu0 0.0
    %203 = vmatpush1.msra.mxu0 0.0
    %204 = vmatprep.subr.mxu0 0.0
    %205 = vmatpush1.msra.mxu0 0.0
    %206 = vmatprep.subr.mxu0 0.0
    %207 = vmatpush1.msra.mxu0 0.0
    %208 = vmatprep.subr.mxu0 0.0
    %209 = vmatpush1.msra.mxu0 0.0
    %210 = vmatprep.subr.mxu0 0.0
    %211 = vmatpush1.msra.mxu0 0.0
    %212 = vmatprep.subr.mxu0 0.0
    %213 = vmatpush1.msra.mxu0 0.0
    %214 = vmatprep.subr.mxu0 0.0
    %215 = vmatpush1.msra.mxu0 0.0
    %216 = vmatprep.subr.mxu0 0.0
    %217 = vmatpush1.msra.mxu0 0.0
    %218 = vmatprep.subr.mxu0 0.0
    %219 = vmatpush1.msra.mxu0 0.0
    %220 = vmatprep.subr.mxu0 0.0
    %221 = vmatpush1.msra.mxu0 0.0
    %222 = vmatprep.subr.mxu0 0.0
    %223 = vmatpush1.msra.mxu0 0.0
    %224 = vmatprep.subr.mxu0 0.0
    %225 = vmatpush1.msra.mxu0 0.0
    %226 = vmatprep.subr.mxu0 0.0
    %227 = vmatpush1.msra.mxu0 0.0
    %228 = vmatprep.subr.mxu0 0.0
    %229 = vmatpush1.msra.mxu0 0.0
    %230 = vmatprep.subr.mxu0 0.0
    %231 = vmatpush1.msra.mxu0 0.0
    %232 = vmatprep.subr.mxu0 0.0
    %233 = vmatpush1.msra.mxu0 0.0
    %234 = vmatprep.subr.mxu0 0.0
    %235 = vmatpush1.msra.mxu0 0.0
    %236 = vmatprep.subr.mxu0 0.0
    %237 = vmatpush1.msra.mxu0 0.0
    %238 = vmatprep.subr.mxu0 0.0
    %239 = vmatpush1.msra.mxu0 0.0
    %240 = vmatprep.subr.mxu0 0.0
    %241 = vmatpush1.msra.mxu0 0.0
    %242 = vmatprep.subr.mxu0 0.0
    %243 = vmatpush1.msra.mxu0 0.0
    %244 = vmatprep.subr.mxu0 0.0
    %245 = vmatpush1.msra.mxu0 0.0
    %246 = vmatprep.subr.mxu0 0.0
    %247 = vmatpush1.msra.mxu0 0.0
    %248 = vmatprep.subr.mxu0 0.0
    %249 = vmatpush1.msra.mxu0 0.0
    %250 = vmatprep.subr.mxu0 0.0
    %251 = vmatpush1.msra.mxu0 0.0
    %252 = vmatprep.mubr.f32.mxu0 0.0
    %253 = vmatmul.mubr.f32.gmra.mrb[0].mxu0 %v186
    %v254 = vpop.f32.mrb[0].mxu0
    %v255 = vadd.f32 %v102, %v254
    %v256 = vpop.f32.mrb[0].mxu0
    %257 = vdwg.mxu0
    %v258 = vmul.f32 %v255, %v255
    %259 = vadd.xlane.f32.xlu0 %v258
    %v260 = vpop.xlane.xlu0 %259
    %v261 = vmax.f32 %v260, 1e-30
    %v262 = vrsqrt.pop %v261
    %v263 = vmul.f32 %v255, %v262
    %v264 = vld [vmem:[#allocation7] sm:$0xff]
    %v265 = vld [vmem:[#allocation10] sm:$0xff]
    %v266 = vld [vmem:[#allocation10 + $0x8] sm:$0xff]
    %v267 = vld [vmem:[#allocation10 + $0x10] sm:$0xff]
    %v268 = vld [vmem:[#allocation10 + $0x18] sm:$0xff]
    %v269 = vld [vmem:[#allocation10 + $0x20] sm:$0xff]
    %v270 = vld [vmem:[#allocation10 + $0x28] sm:$0xff]
    %v271 = vld [vmem:[%s7] sm:$0x1]
    %v273 = vlaneseq
    %v274 = vshrl.u32 %v273, 7
    %v275 = vsub.s32 0, %v274
    %v276 = vrot.slane %v271, %v275
    %vm278 = vcmask 392192
    %v280 = vsel %vm278, %v264, 0
    %282 = vmatprep.subr.mxu0 0.0
    %283 = vmatpush1.msra.mxu0 %v265
    %284 = vmatprep.subr.mxu0 0.0
    %285 = vmatpush1.msra.mxu0 %v266
    %286 = vmatprep.subr.mxu0 0.0
    %287 = vmatpush1.msra.mxu0 %v267
    %288 = vmatprep.subr.mxu0 0.0
    %289 = vmatpush1.msra.mxu0 %v268
    %290 = vmatprep.subr.mxu0 0.0
    %291 = vmatpush1.msra.mxu0 %v269
    %292 = vmatprep.subr.mxu0 0.0
    %293 = vmatpush1.msra.mxu0 %v270
    %294 = vmatprep.subr.mxu0 0.0
    %295 = vmatpush1.msra.mxu0 0.0
    %296 = vmatprep.subr.mxu0 0.0
    %297 = vmatpush1.msra.mxu0 0.0
    %298 = vmatprep.subr.mxu0 0.0
    %299 = vmatpush1.msra.mxu0 0.0
    %300 = vmatprep.subr.mxu0 0.0
    %301 = vmatpush1.msra.mxu0 0.0
    %302 = vmatprep.subr.mxu0 0.0
    %303 = vmatpush1.msra.mxu0 0.0
    %304 = vmatprep.subr.mxu0 0.0
    %305 = vmatpush1.msra.mxu0 0.0
    %306 = vmatprep.subr.mxu0 0.0
    %307 = vmatpush1.msra.mxu0 0.0
    %308 = vmatprep.subr.mxu0 0.0
    %309 = vmatpush1.msra.mxu0 0.0
    %310 = vmatprep.subr.mxu0 0.0
    %311 = vmatpush1.msra.mxu0 0.0
    %312 = vmatprep.subr.mxu0 0.0
    %313 = vmatpush1.msra.mxu0 0.0
    %314 = vmatprep.subr.mxu0 0.0
    %315 = vmatpush1.msra.mxu0 0.0
    %316 = vmatprep.subr.mxu0 0.0
    %317 = vmatpush1.msra.mxu0 0.0
    %318 = vmatprep.subr.mxu0 0.0
    %319 = vmatpush1.msra.mxu0 0.0
    %320 = vmatprep.subr.mxu0 0.0
    %321 = vmatpush1.msra.mxu0 0.0
    %322 = vmatprep.subr.mxu0 0.0
    %323 = vmatpush1.msra.mxu0 0.0
    %324 = vmatprep.subr.mxu0 0.0
    %325 = vmatpush1.msra.mxu0 0.0
    %326 = vmatprep.subr.mxu0 0.0
    %327 = vmatpush1.msra.mxu0 0.0
    %328 = vmatprep.subr.mxu0 0.0
    %329 = vmatpush1.msra.mxu0 0.0
    %330 = vmatprep.subr.mxu0 0.0
    %331 = vmatpush1.msra.mxu0 0.0
    %332 = vmatprep.subr.mxu0 0.0
    %333 = vmatpush1.msra.mxu0 0.0
    %334 = vmatprep.subr.mxu0 0.0
    %335 = vmatpush1.msra.mxu0 0.0
    %336 = vmatprep.subr.mxu0 0.0
    %337 = vmatpush1.msra.mxu0 0.0
    %338 = vmatprep.subr.mxu0 0.0
    %339 = vmatpush1.msra.mxu0 0.0
    %340 = vmatprep.subr.mxu0 0.0
    %341 = vmatpush1.msra.mxu0 0.0
    %342 = vmatprep.subr.mxu0 0.0
    %343 = vmatpush1.msra.mxu0 0.0
    %344 = vmatprep.subr.mxu0 0.0
    %345 = vmatpush1.msra.mxu0 0.0
    %346 = vmatprep.mubr.f32.mxu0 0.0
    %347 = vmatmul.mubr.f32.gmra.mrb[0].mxu0 %v280
    %v348 = vpop.f32.mrb[0].mxu0
    %v349 = vadd.f32 %v276, %v348
    %v350 = vpop.f32.mrb[0].mxu0
    %351 = vdwg.mxu0
    %v352 = vmul.f32 %v349, %v349
    %353 = vadd.xlane.f32.xlu0 %v352
    %v354 = vpop.xlane.xlu0 %353
    %v355 = vmax.f32 %v354, 1e-30
    %v356 = vrsqrt.pop %v355
    %v357 = vmul.f32 %v349, %v356
    %v358 = vld [vmem:[%s3] sm:$0xff]
    %v360 = vsel %vm278, %v358, 0
    %362 = vmatprep.subr.mxu0 0.0
    %363 = vmatpush1.msra.mxu0 %v265
    %364 = vmatprep.subr.mxu0 0.0
    %365 = vmatpush1.msra.mxu0 %v266
    %366 = vmatprep.subr.mxu0 0.0
    %367 = vmatpush1.msra.mxu0 %v267
    %368 = vmatprep.subr.mxu0 0.0
    %369 = vmatpush1.msra.mxu0 %v268
    %370 = vmatprep.subr.mxu0 0.0
    %371 = vmatpush1.msra.mxu0 %v269
    %372 = vmatprep.subr.mxu0 0.0
    %373 = vmatpush1.msra.mxu0 %v270
    %374 = vmatprep.subr.mxu0 0.0
    %375 = vmatpush1.msra.mxu0 0.0
    %376 = vmatprep.subr.mxu0 0.0
    %377 = vmatpush1.msra.mxu0 0.0
    %378 = vmatprep.subr.mxu0 0.0
    %379 = vmatpush1.msra.mxu0 0.0
    %380 = vmatprep.subr.mxu0 0.0
    %381 = vmatpush1.msra.mxu0 0.0
    %382 = vmatprep.subr.mxu0 0.0
    %383 = vmatpush1.msra.mxu0 0.0
    %384 = vmatprep.subr.mxu0 0.0
    %385 = vmatpush1.msra.mxu0 0.0
    %386 = vmatprep.subr.mxu0 0.0
    %387 = vmatpush1.msra.mxu0 0.0
    %388 = vmatprep.subr.mxu0 0.0
    %389 = vmatpush1.msra.mxu0 0.0
    %390 = vmatprep.subr.mxu0 0.0
    %391 = vmatpush1.msra.mxu0 0.0
    %392 = vmatprep.subr.mxu0 0.0
    %393 = vmatpush1.msra.mxu0 0.0
    %394 = vmatprep.subr.mxu0 0.0
    %395 = vmatpush1.msra.mxu0 0.0
    %396 = vmatprep.subr.mxu0 0.0
    %397 = vmatpush1.msra.mxu0 0.0
    %398 = vmatprep.subr.mxu0 0.0
    %399 = vmatpush1.msra.mxu0 0.0
    %400 = vmatprep.subr.mxu0 0.0
    %401 = vmatpush1.msra.mxu0 0.0
    %402 = vmatprep.subr.mxu0 0.0
    %403 = vmatpush1.msra.mxu0 0.0
    %404 = vmatprep.subr.mxu0 0.0
    %405 = vmatpush1.msra.mxu0 0.0
    %406 = vmatprep.subr.mxu0 0.0
    %407 = vmatpush1.msra.mxu0 0.0
    %408 = vmatprep.subr.mxu0 0.0
    %409 = vmatpush1.msra.mxu0 0.0
    %410 = vmatprep.subr.mxu0 0.0
    %411 = vmatpush1.msra.mxu0 0.0
    %412 = vmatprep.subr.mxu0 0.0
    %413 = vmatpush1.msra.mxu0 0.0
    %414 = vmatprep.subr.mxu0 0.0
    %415 = vmatpush1.msra.mxu0 0.0
    %416 = vmatprep.subr.mxu0 0.0
    %417 = vmatpush1.msra.mxu0 0.0
    %418 = vmatprep.subr.mxu0 0.0
    %419 = vmatpush1.msra.mxu0 0.0
    %420 = vmatprep.subr.mxu0 0.0
    %421 = vmatpush1.msra.mxu0 0.0
    %422 = vmatprep.subr.mxu0 0.0
    %423 = vmatpush1.msra.mxu0 0.0
    %424 = vmatprep.subr.mxu0 0.0
    %425 = vmatpush1.msra.mxu0 0.0
    %426 = vmatprep.mubr.f32.mxu0 0.0
    %427 = vmatmul.mubr.f32.gmra.mrb[0].mxu0 %v360
    %v428 = vpop.f32.mrb[0].mxu0
    %v429 = vadd.f32 %v276, %v428
    %v430 = vpop.f32.mrb[0].mxu0
    %431 = vdwg.mxu0
    %v432 = vmul.f32 %v429, %v429
    %433 = vadd.xlane.f32.xlu0 %v432
    %v434 = vpop.xlane.xlu0 %433
    %v435 = vmax.f32 %v434, 1e-30
    %v436 = vrsqrt.pop %v435
    %v437 = vmul.f32 %v429, %v436
    %v438 = vmul.f32 %v183, %v357
    %439 = vadd.xlane.f32.xlu0 %v438
    %v440 = vpop.xlane.xlu0 %439
    %v441 = vmul.f32 %v183, %v437
    %442 = vadd.xlane.f32.xlu0 %v441
    %v443 = vpop.xlane.xlu0 %442
    %v444 = vmul.f32 %v357, %v263
    %445 = vadd.xlane.f32.xlu0 %v444
    %v446 = vpop.xlane.xlu0 %445
    %v447 = vlaneseq
    %v448 = vand.u32 %v447, 127
    %vm449 = vcmp.le.s32.totalorder %v448, 1
    %v450 = vsel %vm449, %v440, 0.0
    %vm451 = vcmp.eq.s32.totalorder %v448, 2
    %v452 = vsel %vm451, %v443, 0.0
    %v453 = vadd.f32 %v450, %v452
    %vm454 = vcmp.eq.s32.totalorder %v448, 3
    %v455 = vsel %vm454, %v446, 0.0
    %v456 = vadd.f32 %v453, %v455
    %457 = vst [vmem:[#allocation11] sm:$0xff] %v456
    // Predicated region
    $region54: #{tpu_custom_call.1} parent=1 // pred_check
      _
    $region55: #{tpu_custom_call.1} parent=1 // pred_check_branch
      %459 = sbr.rel (0) target = $region57
    $region56: #{tpu_custom_call.1} parent=1 // pred_region
      %s461 = ssub.s32 128, 128
      %462 = vsyncadd [#allocation4], %s461
      %s464 = sshll.u32 [#allocation11], 4
      %s465 = int_to_ptr.vmem [resolvable:$true] %s464
      %467 = dma.vmem_to_hbm [thread:$0]  %s465, 128, %s8, [#allocation4]
    $region57: #{tpu_custom_call.1} parent=1 // pred_fallthru
      _
    // Predicated region
    $region58: #{tpu_custom_call.1} parent=1 // pred_check
      _
    $region59: #{tpu_custom_call.1} parent=1 // pred_check_branch
      %469 = sbr.rel (0) target = $region61
    $region60: #{tpu_custom_call.1} parent=1 // pred_region
      %470 = dma.done [#allocation4], 128
    $region61: #{tpu_custom_call.1} parent=1 // pred_fallthru
      _
    %471 = vsyncpa [#allocation3], 1
    %472 = vsyncpa [#allocation6], 1
    %473 = vsyncpa [#allocation9], 1
    %474 = vsyncpa [#allocation4], 1

</llo_original>
